<compile_context>
chip_gen: v7x
topology: tpu7x:2x2x1
jax: 0.10.0
libtpu: 0.0.40
codegen_flags: <defaults>
</compile_context>

<pallas_src>
import math

import jax
import jax.numpy as jnp
from jax.experimental import pallas as pl
from jax.experimental.pallas import tpu as pltpu

LANE = 128
MIN_ROW_STEPS = 4          # >= 2 pipelined blocks per TensorCore on v7x (2 TCs/chip)


def _first_layer_kernel(x_ref, w_ref, o_ref):
    # x_ref: (tile_rows, tile_f), w_ref: (1, tile_f), o_ref: (tile_rows, tile_f)
    w_relu = jnp.maximum(w_ref[...], 0)          # F.relu(weight) — hidden under DMA
    o_ref[...] = x_ref[...] * w_relu              # broadcast across sublanes (rows)


def _vmem_capacity_bytes():
    """Physical VMEM per TensorCore, with a conservative fallback (v7x: 64 MiB)."""
    try:
        return int(pltpu.get_tpu_info().vmem_capacity_bytes)
    except Exception:
        return 64 * 1024 * 1024


def first_layer(x, weight):
    """x: [..., F], weight: [F]. Returns x * relu(weight), same shape/dtype as x."""
    orig_shape = x.shape
    n_features = int(weight.shape[-1])
    assert orig_shape[-1] == n_features

    dtype = x.dtype
    itemsize = jnp.dtype(dtype).itemsize
    sublane = {4: 8, 2: 16, 1: 32}.get(itemsize, 8)

    # ---- Generation-aware budgets (v5e/v6e: 128 MiB VMEM, v7x: 64 MiB per TC).
    vmem_cap = _vmem_capacity_bytes()
    big_vmem = vmem_cap >= 100 * 1024 * 1024
    max_tile_f = 8192 if big_vmem else 4096            # feature-tile cap
    target_block_bytes = (4 if big_vmem else 2) * 1024 * 1024

    rows = x.size // n_features
    w = weight.astype(dtype)

    # ---- Lane-dense folding: [rows, F] -> [rows*F/L, L] with L = lcm(F, 128)
    # whenever that is an exact, free (contiguous) reshape.
    rows2, feat2, fold = rows, n_features, 1
    if n_features % LANE != 0:
        L = (n_features * LANE) // math.gcd(n_features, LANE)   # lcm(F, 128)
        if L <= max_tile_f and (rows * n_features) % L == 0:
            fold = L // n_features
            rows2, feat2 = (rows * n_features) // L, L

    x2 = x.reshape(rows2, feat2)                        # contiguous reshape: no copy
    if fold > 1:
        w2 = jnp.tile(w, fold).reshape(1, feat2)        # tiny (L elements)
    else:
        w2 = w.reshape(1, feat2)

    # ---- Last-resort robustness: huge ragged F that cannot fold and whose
    # full-dim block would blow the budget -> one-time pad of F to a 128 multiple.
    out_feat = feat2
    pad_f = 0
    if feat2 % LANE != 0 and sublane * feat2 * itemsize > target_block_bytes:
        pad_f = (-feat2) % LANE
        x2 = jnp.pad(x2, ((0, 0), (0, pad_f)))
        w2 = jnp.pad(w2, ((0, 0), (0, pad_f)))
        feat2 += pad_f

    # ---- Feature tiling: multiple of 128, or the full (small, ragged) dim.
    if feat2 % LANE == 0:
        tile_f = min(feat2, max_tile_f)
    else:
        tile_f = feat2

    # ---- Row tiling: fill the per-block byte budget, but keep >= MIN_ROW_STEPS
    # grid steps along rows when rows permit (>= 2 pipelined blocks per TC on v7x).
    tile_rows = max(sublane, target_block_bytes // (tile_f * itemsize))
    tile_rows = (tile_rows // sublane) * sublane
    if rows2 <= sublane:
        tile_rows = rows2                               # full-dim block is always legal
    else:
        cap = pl.cdiv(pl.cdiv(rows2, sublane), MIN_ROW_STEPS) * sublane
        tile_rows = max(sublane, min(tile_rows, cap))

    row_steps = pl.cdiv(rows2, tile_rows)
    grid = (row_steps, pl.cdiv(feat2, tile_f))
    block_bytes = tile_rows * tile_f * itemsize

    # ---- Pipeline depth: a third input buffer hides DMA-issue jitter when the
    # blocks are small and there are enough steps; budget-check before enabling.
    def _vmem_needed(nbuf_x):
        return ((nbuf_x + 2) * block_bytes              # x blocks + double-buffered out
                + 2 * 2 * tile_f * itemsize             # weight blocks
                + (2 << 20))                            # compiler scratch headroom

    x_buffers = 3 if (block_bytes <= 2 * 1024 * 1024 and row_steps >= 3) else 2
    if _vmem_needed(x_buffers) > vmem_cap // 2:
        x_buffers = 2
    vmem_needed = _vmem_needed(x_buffers)
    vmem_limit = int(min(max(vmem_needed, 32 * 1024 * 1024), vmem_cap - (8 << 20)))

    x_spec_kwargs = {}
    if x_buffers != 2:
        x_spec_kwargs["pipeline_mode"] = pl.Buffered(x_buffers)
    x_spec = pl.BlockSpec((tile_rows, tile_f), lambda i, j: (i, j), **x_spec_kwargs)

    cost = pl.CostEstimate(
        flops=2 * rows2 * feat2,
        transcendentals=0,
        bytes_accessed=2 * rows2 * feat2 * itemsize + feat2 * itemsize,
    )

    # TODO(synk): on v7x verify in xprof that both TensorCores stream the row
    # axis; if not, sweep dimension_semantics=(pltpu.CORE_PARALLEL, pltpu.PARALLEL).
    out = pl.pallas_call(
        _first_layer_kernel,
        out_shape=jax.ShapeDtypeStruct((rows2, feat2), dtype),
        grid_spec=pltpu.PrefetchScalarGridSpec(
            num_scalar_prefetch=0,
            grid=grid,
            in_specs=[
                x_spec,
                pl.BlockSpec((1, tile_f), lambda i, j: (0, j)),
            ],
            out_specs=pl.BlockSpec((tile_rows, tile_f), lambda i, j: (i, j)),
        ),
        compiler_params=pltpu.CompilerParams(
            dimension_semantics=("parallel", "parallel"),
            vmem_limit_bytes=vmem_limit,
        ),
        cost_estimate=cost,
    )(x2, w2)

    if pad_f:
        out = out[:, :out_feat]
    return out.reshape(orig_shape)


if __name__ == "__main__":
    key = jax.random.PRNGKey(0)
    kx, kw, kx2, kx3, kx4 = jax.random.split(key, 5)

    def check(x, w):
        out = jax.block_until_ready(first_layer(x, w))
        ref = x * jnp.maximum(w, 0.0)
        assert out.shape == x.shape and out.dtype == x.dtype
        assert jnp.allclose(out, ref, atol=1e-6, rtol=1e-6)

    # Case 1: module-style [batch, seq, n_features]; F=32 folds to lane-dense 128.
    n_features = 32
    x = jax.random.normal(kx, (2, 8, n_features), dtype=jnp.float32)
    weight = jnp.ones((n_features,), dtype=jnp.float32) + \
        jax.random.normal(kw, (n_features,), dtype=jnp.float32)   # some entries < 0
    check(x, weight)

    # Case 2: F = 128 (no fold), ragged row edge block handled by Pallas masking.
    check(jax.random.normal(kx2, (3, 5, 128), dtype=jnp.float32),
          jax.random.normal(kw, (128,), dtype=jnp.float32))

    # Case 3: F = 96 -> generalized lcm fold to 384 lanes.
    check(jax.random.normal(kx3, (2, 8, 96), dtype=jnp.float32),
          jax.random.normal(jax.random.fold_in(kw, 1), (96,), dtype=jnp.float32))

    # Case 4: enough rows for >= 4 row grid steps and the Buffered(3) input path.
    check(jax.random.normal(kx4, (4, 64, 128), dtype=jnp.float32),
          jax.random.normal(jax.random.fold_in(kw, 2), (128,), dtype=jnp.float32))

    print("KERNEL_OK")
</pallas_src>

<mosaic_0001>
module attributes {stable_mosaic.version = 11 : i64} {
  func.func @_first_layer_kernel(%arg0: i32, %arg1: i32, %arg2: memref<4x128xf32, #tpu.memory_space<vmem>>, %arg3: memref<1x128xf32, #tpu.memory_space<vmem>>, %arg4: memref<4x128xf32, #tpu.memory_space<vmem>>) attributes {dimension_semantics = [#tpu.dimension_semantics<parallel>, #tpu.dimension_semantics<parallel>], iteration_bounds = array<i64: 1, 1>, scalar_prefetch = 0 : i64, scratch_operands = 0 : i64, tpu.core_type = #tpu.core_type<tc>, window_params = [{transform_indices = @transform_0, window_bounds = array<i64: 4, 128>}, {transform_indices = @transform_1, window_bounds = array<i64: 1, 128>}, {transform_indices = @transform_2, window_bounds = array<i64: 4, 128>}]} {
    %c0 = arith.constant 0 : index
    %c0_0 = arith.constant 0 : index
    %0 = vector.load %arg3[%c0, %c0_0] : memref<1x128xf32, #tpu.memory_space<vmem>>, vector<1x128xf32>
    %cst = arith.constant 0.000000e+00 : f32
    %1 = vector.broadcast %cst : f32 to vector<1x128xf32>
    %2 = arith.maximumf %0, %1 : vector<1x128xf32>
    %c0_1 = arith.constant 0 : index
    %c0_2 = arith.constant 0 : index
    %3 = vector.load %arg2[%c0_1, %c0_2] : memref<4x128xf32, #tpu.memory_space<vmem>>, vector<4x128xf32>
    %4 = vector.broadcast %2 : vector<1x128xf32> to vector<4x128xf32>
    %5 = arith.mulf %3, %4 : vector<4x128xf32>
    %c0_3 = arith.constant 0 : index
    %c0_4 = arith.constant 0 : index
    %6 = vector.load %arg4[%c0_3, %c0_4] : memref<4x128xf32, #tpu.memory_space<vmem>>, vector<4x128xf32>
    tpu.vector_store %arg4[%c0_3, %c0_4], %5 {strides = array<i32>} : memref<4x128xf32, #tpu.memory_space<vmem>>, vector<4x128xf32>,
    return
  }
  func.func @transform_0(%arg0: i32, %arg1: i32) -> (i32, i32) {
    %c0_i32 = arith.constant 0 : i32
    return %arg0, %arg1 : i32, i32
  }
  func.func @transform_1(%arg0: i32, %arg1: i32) -> (i32, i32) {
    %c0_i32 = arith.constant 0 : i32
    %c0_i32_0 = arith.constant 0 : i32
    return %c0_i32, %arg1 : i32, i32
  }
  func.func @transform_2(%arg0: i32, %arg1: i32) -> (i32, i32) {
    %c0_i32 = arith.constant 0 : i32
    return %arg0, %arg1 : i32, i32
  }
}

</mosaic_0001>

<llo_original>
// kernel: tpu_custom_call.1
$region0: #{tpu_custom_call.1}
  #allocation0 [shape = 'u32[]', space=smem, size = 0x4, offset = 0x4, fixed_abs, tag = 'smem constant byte address 0x4 - core index']
  #allocation1 [shape = 'u32[144,128]{1,0:T(1,128)}', space=vmem, size = 0x12000, scoped, tag = 'internal scratch']
  %s0 = inlined_call_operand.hbm [shape: f32[4,128], index: 0, kind: input, shape index: {}]
  %s1 = inlined_call_operand.vmem [shape: f32[1,128], index: 1, kind: input, shape index: {}]
  %s2 = inlined_call_operand.hbm [shape: f32[4,128], index: 2, kind: output, shape index: {}]
  %s3 = sld [smem:[#allocation0]]
  $region22: #{tpu_custom_call.1} parent=0
    _
  %s5 = ssub.s32 1, %s3
  %s6 = scalar_select 0, %s5, %s3
  $region1: #{tpu_custom_call.1} parent=0
    #allocation2 [shape = 'u8[2048]{0}', space=vmem, size = 0x800, scoped, tag = 'input window, operand 0, single buffered']
    #allocation3 [shape = 's32[1]{0}', space=sflag, size = 0x4, scoped, tag = 'scoped memory for tpu_custom_call.1']
    #allocation4 [shape = 's32[1]{0}', space=sflag, size = 0x4, scoped, tag = 'scoped memory for tpu_custom_call.1']
    #allocation5 [shape = 'u8[2048]{0}', space=vmem, size = 0x800, scoped, tag = 'output window, operand 0, single buffered']
    %7 = vsyncpa [#allocation3], 0
    %8 = vsyncpa [#allocation4], 0
    // Predicated region
    $region2: #{tpu_custom_call.1} parent=1 // pred_check
      _
    $region3: #{tpu_custom_call.1} parent=1 // pred_check_branch
      %10 = sbr.rel (0) target = $region5
    $region4: #{tpu_custom_call.1} parent=1 // pred_region
      %s12 = ssub.s32 64, 64
      %13 = vsyncadd [#allocation3], %s12
      %s15 = sshll.u32 [#allocation2], 4
      %s16 = int_to_ptr.vmem [resolvable:$true] %s15
      %18 = dma.hbm_to_vmem [thread:$0]  %s0, 64, %s16, [#allocation3]
    $region5: #{tpu_custom_call.1} parent=1 // pred_fallthru
      _
    // Predicated region
    $region6: #{tpu_custom_call.1} parent=1 // pred_check
      _
    $region7: #{tpu_custom_call.1} parent=1 // pred_check_branch
      %20 = sbr.rel (0) target = $region9
    $region8: #{tpu_custom_call.1} parent=1 // pred_region
      _
    $region9: #{tpu_custom_call.1} parent=1 // pred_fallthru
      _
    // Predicated region
    $region10: #{tpu_custom_call.1} parent=1 // pred_check
      _
    $region11: #{tpu_custom_call.1} parent=1 // pred_check_branch
      %22 = sbr.rel (0) target = $region13
    $region12: #{tpu_custom_call.1} parent=1 // pred_region
      %23 = dma.done [#allocation3], 64
    $region13: #{tpu_custom_call.1} parent=1 // pred_fallthru
      _
    %v24 = vld [vmem:[%s1] sm:$0x1]
    %v25 = vmax.f32 %v24, 0.0
    %v26 = vld [vmem:[#allocation2] sm:$0xf]
    %v28 = vlaneseq
    %v29 = vshrl.u32 %v28, 7
    %v30 = vsub.s32 0, %v29
    %v31 = vrot.slane %v25, %v30
    %v33 = vmul.f32 %v26, %v31
    %34 = vst [vmem:[#allocation5] sm:$0xf] %v33
    // Predicated region
    $region14: #{tpu_custom_call.1} parent=1 // pred_check
      _
    $region15: #{tpu_custom_call.1} parent=1 // pred_check_branch
      %36 = sbr.rel (0) target = $region17
    $region16: #{tpu_custom_call.1} parent=1 // pred_region
      %s38 = ssub.s32 64, 64
      %39 = vsyncadd [#allocation4], %s38
      %s41 = sshll.u32 [#allocation5], 4
      %s42 = int_to_ptr.vmem [resolvable:$true] %s41
      %44 = dma.vmem_to_hbm [thread:$0]  %s42, 64, %s2, [#allocation4]
    $region17: #{tpu_custom_call.1} parent=1 // pred_fallthru
      _
    // Predicated region
    $region18: #{tpu_custom_call.1} parent=1 // pred_check
      _
    $region19: #{tpu_custom_call.1} parent=1 // pred_check_branch
      %46 = sbr.rel (0) target = $region21
    $region20: #{tpu_custom_call.1} parent=1 // pred_region
      %47 = dma.done [#allocation4], 64
    $region21: #{tpu_custom_call.1} parent=1 // pred_fallthru
      _
    %48 = vsyncpa [#allocation3], 1
    %49 = vsyncpa [#allocation4], 1

</llo_original>
